<compile_context>
chip_gen: v5e
topology: v5e:2x2
jax: 0.10.0
libtpu: 0.0.40
codegen_flags: <defaults>
</compile_context>

<pallas_src>
import functools

import numpy as np
import jax
import jax.numpy as jnp
from jax.experimental import pallas as pl
from jax.experimental.pallas import tpu as pltpu


# ---------------------------------------------------------------------------
# Small host-side helpers
# ---------------------------------------------------------------------------
def _round_up(x: int, m: int) -> int:
    return ((x + m - 1) // m) * m


def _cdiv(a: int, b: int) -> int:
    return (a + b - 1) // b


def _vmem_capacity_bytes() -> int:
    """Per-core VMEM capacity; conservative 64 MiB fallback (v7x-safe)."""
    try:
        info = pltpu.get_tpu_info()
        cap = getattr(info, "vmem_capacity_bytes", None)
        if cap:
            return int(cap)
    except Exception:
        pass
    return 64 << 20


def _vmem_limit_bytes(footprint: int, cap: int) -> int:
    """Actual footprint + ~30% headroom for compiler scratch, capped at 0.85*cap."""
    return int(min(cap * 0.85, max(footprint * 1.3, 32 << 20)))


# ---------------------------------------------------------------------------
# Pooling-matrix construction (plain host-side numpy — static, deterministic)
# ---------------------------------------------------------------------------
def _adaptive_pool_1d_matrix(in_size: int, out_size: int) -> np.ndarray:
    """(in_size, out_size) matrix; column j averages PyTorch's adaptive bin j."""
    m = np.zeros((in_size, out_size), dtype=np.float32)
    for j in range(out_size):
        start = (j * in_size) // out_size
        end = -(-((j + 1) * in_size) // out_size)  # ceil division
        m[start:end, j] = 1.0 / float(end - start)
    return m


def _build_psp_matrix(h: int, w: int, sizes) -> np.ndarray:
    """(h*w, sum(s*s)) matrix implementing all adaptive-avg-pool stages."""
    blocks = []
    for s in sizes:
        mh = _adaptive_pool_1d_matrix(h, s)  # (h, s)
        mw = _adaptive_pool_1d_matrix(w, s)  # (w, s)
        # kron: M[hh*w + ww, i*s + j] = mh[hh, i] * mw[ww, j]
        blocks.append(np.kron(mh, mw).astype(np.float32))
    return np.concatenate(blocks, axis=1)  # (h*w, total_bins)


# ---------------------------------------------------------------------------
# Pallas kernels
# ---------------------------------------------------------------------------
def _psp_kernel_single(x_ref, m_ref, o_ref):
    # Single K step: x_ref (tile_nc, hw), m_ref (hw, n_pad) -> o_ref (tile_nc, n_pad).
    o_ref[...] = jnp.dot(
        x_ref[...], m_ref[...], preferred_element_type=jnp.float32
    ).astype(o_ref.dtype)


def _psp_kernel_acc(x_ref, m_ref, o_ref, acc_ref, *, hw, tile_k):
    # K-tiled fallback: x_ref (tile_nc, tile_k), m_ref (tile_k, n_pad).
    k = pl.program_id(1)

    @pl.when(k == 0)
    def _init():
        acc_ref[...] = jnp.zeros_like(acc_ref)

    x = x_ref[...]
    # The last K tile may be a partial edge block; zero any column >= hw so
    # no garbage ever enters the reduction (K axis must be exact).
    col = jax.lax.broadcasted_iota(jnp.int32, x.shape, 1) + k * tile_k
    x = jnp.where(col < hw, x, jnp.zeros_like(x))

    acc_ref[...] += jnp.dot(x, m_ref[...], preferred_element_type=jnp.float32)

    @pl.when(k == pl.num_programs(1) - 1)
    def _finalize():
        o_ref[...] = acc_ref[...].astype(o_ref.dtype)


# ---------------------------------------------------------------------------
# Host wrapper
# ---------------------------------------------------------------------------
def psp_module(feats: jax.Array, sizes=(1, 3, 6, 8)) -> jax.Array:
    """feats: (n, c, h, w) -> (n, c, sum(s*s for s in sizes)). Matches PyTorch."""
    n, c, h, w = feats.shape
    total_bins = sum(s * s for s in sizes)
    nc = n * c
    hw = h * w
    n_pad = _round_up(total_bins, 128)  # lane-dense output columns

    x_dtype = feats.dtype
    # Stream the pooling matrix in the input's dtype only if the input is
    # already half-precision (no wrapper-side cast of X, ever).
    if x_dtype in (jnp.bfloat16, jnp.float16):
        m_dtype = x_dtype
    else:
        m_dtype = jnp.float32
    x_elt = jnp.dtype(x_dtype).itemsize
    m_elt = jnp.dtype(m_dtype).itemsize
    o_elt = x_elt

    vmem_cap = _vmem_capacity_bytes()
    budget = int(vmem_cap * 0.7)

    # Pure reshape — no jnp.pad materialization of the big X slab.
    x2d = feats.reshape(nc, hw)

    pool_mat_np = _build_psp_matrix(h, w, sizes)  # (hw, total_bins)
    pool_mat_np = np.pad(pool_mat_np, ((0, 0), (0, n_pad - total_bins)))

    # ---- tile over n*c: ~8 parallel steps (>=2 per TC on v7x), <=512 rows ---
    TARGET_STEPS = 8
    TILE_NC_CAP = 512

    def _pick_tile_nc(max_rows: int) -> int:
        t = _round_up(_cdiv(nc, TARGET_STEPS), 8)
        t = min(t, TILE_NC_CAP, max_rows)
        return max(t, 8)

    # ---- Path A: full K in one block (covers all realistic PSP inputs) -----
    m_bytes = 2 * hw * n_pad * m_elt                  # pessimistic 2x buffers
    per_row = 2 * hw * x_elt + 2 * n_pad * o_elt      # x + out, double-buffered
    max_rows_a = (budget - m_bytes) // per_row if budget > m_bytes else 0
    max_rows_a = (max_rows_a // 8) * 8

    if max_rows_a >= 8:
        tile_nc = _pick_tile_nc(max_rows_a)
        grid = (_cdiv(nc, tile_nc),)
        footprint = m_bytes + tile_nc * per_row

        out2d = pl.pallas_call(
            _psp_kernel_single,
            out_shape=jax.ShapeDtypeStruct((nc, n_pad), x_dtype),
            grid_spec=pltpu.PrefetchScalarGridSpec(
                num_scalar_prefetch=0,
                grid=grid,
                in_specs=[
                    # X: last dim == full array dim (exempt from 128 rule);
                    # trailing nc tile may be a partial edge block.
                    pl.BlockSpec((tile_nc, hw), lambda i: (i, 0)),
                    # M: constant block index -> DMA'd once, resident in VMEM.
                    pl.BlockSpec((hw, n_pad), lambda i: (0, 0)),
                ],
                out_specs=pl.BlockSpec((tile_nc, n_pad), lambda i: (i, 0)),
            ),
            compiler_params=pltpu.CompilerParams(
                dimension_semantics=("parallel",),
                vmem_limit_bytes=_vmem_limit_bytes(footprint, vmem_cap),
            ),
        )(x2d, jnp.asarray(pool_mat_np, dtype=m_dtype))

    else:
        # ---- Path B: huge feature maps only — balanced, 128-aligned K tiles.
        TK_MAX = 2048
        nk = _cdiv(hw, TK_MAX)
        tile_k = _round_up(_cdiv(hw, nk), 128)
        nk = _cdiv(hw, tile_k)
        k_full = nk * tile_k

        # Zero-pad only the cheap host-built pooling matrix on K (exact).
        pool_pad_np = np.pad(pool_mat_np, ((0, k_full - hw), (0, 0)))

        m_tile_bytes = 2 * tile_k * n_pad * m_elt
        per_row_b = 2 * tile_k * x_elt + 2 * n_pad * o_elt + n_pad * 4  # + f32 acc
        max_rows_b = (budget - m_tile_bytes) // per_row_b if budget > m_tile_bytes else 0
        max_rows_b = max(8, (max_rows_b // 8) * 8)
        tile_nc = _pick_tile_nc(max_rows_b)
        grid = (_cdiv(nc, tile_nc), nk)
        footprint = m_tile_bytes + tile_nc * per_row_b

        kernel = functools.partial(_psp_kernel_acc, hw=hw, tile_k=tile_k)
        out2d = pl.pallas_call(
            kernel,
            out_shape=jax.ShapeDtypeStruct((nc, n_pad), x_dtype),
            grid_spec=pltpu.PrefetchScalarGridSpec(
                num_scalar_prefetch=0,
                grid=grid,
                in_specs=[
                    pl.BlockSpec((tile_nc, tile_k), lambda i, k: (i, k)),
                    pl.BlockSpec((tile_k, n_pad), lambda i, k: (k, 0)),
                ],
                out_specs=pl.BlockSpec((tile_nc, n_pad), lambda i, k: (i, 0)),
                scratch_shapes=[pltpu.VMEM((tile_nc, n_pad), jnp.float32)],
            ),
            compiler_params=pltpu.CompilerParams(
                dimension_semantics=("parallel", "arbitrary"),
                vmem_limit_bytes=_vmem_limit_bytes(footprint, vmem_cap),
            ),
        )(x2d, jnp.asarray(pool_pad_np, dtype=m_dtype))

    # TODO(synk): for tiny n*c on v7x, a K-split across both TensorCores with
    # per-core partial sums could recover ~2x; not needed for typical shapes.

    # Slice off the lane padding and restore (n, c, bins).
    return out2d[:, :total_bins].reshape(n, c, total_bins)


# ---------------------------------------------------------------------------
# Pure-numpy reference (PyTorch adaptive-avg-pool semantics) for sanity check
# ---------------------------------------------------------------------------
def _psp_reference(feats, sizes=(1, 3, 6, 8)):
    n, c, h, w = feats.shape
    xf = np.asarray(feats)
    outs = []
    for s in sizes:
        pooled = np.zeros((n, c, s, s), dtype=np.float32)
        for i in range(s):
            h0, h1 = (i * h) // s, -(-((i + 1) * h) // s)
            for j in range(s):
                w0, w1 = (j * w) // s, -(-((j + 1) * w) // s)
                pooled[:, :, i, j] = xf[:, :, h0:h1, w0:w1].mean(axis=(2, 3))
        outs.append(pooled.reshape(n, c, -1))
    return np.concatenate(outs, axis=-1)


if __name__ == "__main__":
    key = jax.random.PRNGKey(0)
    n, c, h, w = 2, 4, 16, 16
    feats = jax.random.normal(key, (n, c, h, w), dtype=jnp.float32)

    out = psp_module(feats)
    out = jax.block_until_ready(out)

    ref = _psp_reference(feats)
    assert out.shape == (n, c, sum(s * s for s in (1, 3, 6, 8)))
    np.testing.assert_allclose(np.asarray(out), ref, rtol=1e-4, atol=1e-4)

    print("KERNEL_OK")
</pallas_src>

<mosaic_0001>
module attributes {stable_mosaic.version = 11 : i64} {
  func.func @_psp_kernel_single(%arg0: i32, %arg1: memref<8x256xf32, #tpu.memory_space<vmem>>, %arg2: memref<256x128xf32, #tpu.memory_space<vmem>>, %arg3: memref<8x128xf32, #tpu.memory_space<vmem>>) attributes {dimension_semantics = [#tpu.dimension_semantics<parallel>], iteration_bounds = array<i64: 1>, scalar_prefetch = 0 : i64, scratch_operands = 0 : i64, tpu.core_type = #tpu.core_type<tc>, window_params = [{transform_indices = @transform_0, window_bounds = array<i64: 8, 256>}, {pipeline_mode = #tpu.pipeline_mode<synchronous>, transform_indices = @transform_1, window_bounds = array<i64: 256, 128>}, {transform_indices = @transform_2, window_bounds = array<i64: 8, 128>}]} {
    %c0 = arith.constant 0 : index
    %c0_0 = arith.constant 0 : index
    %0 = vector.load %arg1[%c0, %c0_0] : memref<8x256xf32, #tpu.memory_space<vmem>>, vector<8x256xf32>
    %c0_1 = arith.constant 0 : index
    %c0_2 = arith.constant 0 : index
    %1 = vector.load %arg2[%c0_1, %c0_2] : memref<256x128xf32, #tpu.memory_space<vmem>>, vector<256x128xf32>
    %cst = arith.constant dense<0.000000e+00> : vector<8x128xf32>
    %2 = tpu.matmul %0, %1, %cst {dimension_numbers = #tpu.dot_dimension_numbers<[1], [0], [0], [1], [0, 0, 1, 1], [], []>} : vector<8x256xf32>, vector<256x128xf32>, vector<8x128xf32> -> vector<8x128xf32>
    %c0_3 = arith.constant 0 : index
    %c0_4 = arith.constant 0 : index
    %3 = vector.load %arg3[%c0_3, %c0_4] : memref<8x128xf32, #tpu.memory_space<vmem>>, vector<8x128xf32>
    tpu.vector_store %arg3[%c0_3, %c0_4], %2 {strides = array<i32>} : memref<8x128xf32, #tpu.memory_space<vmem>>, vector<8x128xf32>,
    return
  }
  func.func @transform_0(%arg0: i32) -> (i32, i32) {
    %c0_i32 = arith.constant 0 : i32
    %c0_i32_0 = arith.constant 0 : i32
    return %arg0, %c0_i32 : i32, i32
  }
  func.func @transform_1(%arg0: i32) -> (i32, i32) {
    %c0_i32 = arith.constant 0 : i32
    %c0_i32_0 = arith.constant 0 : i32
    %c0_i32_1 = arith.constant 0 : i32
    return %c0_i32, %c0_i32_0 : i32, i32
  }
  func.func @transform_2(%arg0: i32) -> (i32, i32) {
    %c0_i32 = arith.constant 0 : i32
    %c0_i32_0 = arith.constant 0 : i32
    return %arg0, %c0_i32 : i32, i32
  }
}

</mosaic_0001>

<llo_original>
// kernel: tpu_custom_call.1
$region0: #{tpu_custom_call.1}
  #allocation0 [shape = 'u32[]', space=smem, size = 0x4, offset = 0x4, fixed_abs, tag = 'smem constant byte address 0x4 - core index']
  #allocation1 [shape = 'u32[72,128]{1,0:T(1,128)}', space=vmem, size = 0x9000, scoped, tag = 'internal scratch']
  %s0 = inlined_call_operand.hbm [shape: f32[8,256], index: 0, kind: input, shape index: {}]
  %s1 = inlined_call_operand.hbm [shape: f32[256,128], index: 1, kind: input, shape index: {}]
  %s2 = inlined_call_operand.hbm [shape: f32[8,128], index: 2, kind: output, shape index: {}]
  %s3 = sld [smem:[#allocation0]]
  $region26: #{tpu_custom_call.1} parent=0
    _
  %s5 = ssub.s32 1, %s3
  %s6 = scalar_select 0, %s5, %s3
  $region1: #{tpu_custom_call.1} parent=0
    #allocation2 [shape = 'u8[8192]{0}', space=vmem, size = 0x2000, scoped, tag = 'input window, operand 0, single buffered']
    #allocation3 [shape = 's32[1]{0}', space=sflag, size = 0x4, scoped, tag = 'scoped memory for tpu_custom_call.1']
    #allocation4 [shape = 's32[1]{0}', space=sflag, size = 0x4, scoped, tag = 'scoped memory for tpu_custom_call.1']
    #allocation5 [shape = 'u8[131072]{0}', space=vmem, size = 0x20000, scoped, tag = 'input window, operand 1, single buffered']
    #allocation6 [shape = 's32[1]{0}', space=sflag, size = 0x4, scoped, tag = 'scoped memory for tpu_custom_call.1']
    #allocation7 [shape = 'u8[4096]{0}', space=vmem, size = 0x1000, scoped, tag = 'output window, operand 0, single buffered']
    %7 = vsyncpa [#allocation3], 0
    %8 = vsyncpa [#allocation6], 0
    %9 = vsyncpa [#allocation4], 0
    // Predicated region
    $region2: #{tpu_custom_call.1} parent=1 // pred_check
      _
    $region3: #{tpu_custom_call.1} parent=1 // pred_check_branch
      %11 = sbr.rel (0) target = $region5
    $region4: #{tpu_custom_call.1} parent=1 // pred_region
      %13 = vsyncadd [#allocation3], 0
      %s15 = sshll.u32 %s0, 4
      %s16 = int_to_ptr.hbm [resolvable:$true] %s15
      %s17 = sshll.u32 [#allocation2], 4
      %s18 = int_to_ptr.vmem [resolvable:$true] %s17
      %20 = dma.hbm_to_vmem [thread:$0]  %s16, 256, %s18, [#allocation3]
    $region5: #{tpu_custom_call.1} parent=1 // pred_fallthru
      _
    // Predicated region
    $region6: #{tpu_custom_call.1} parent=1 // pred_check
      _
    $region7: #{tpu_custom_call.1} parent=1 // pred_check_branch
      %22 = sbr.rel (0) target = $region9
    $region8: #{tpu_custom_call.1} parent=1 // pred_region
      %24 = vsyncadd [#allocation6], 0
      %s25 = sshll.u32 %s1, 4
      %s26 = int_to_ptr.hbm [resolvable:$true] %s25
      %s27 = sshll.u32 [#allocation5], 4
      %s28 = int_to_ptr.vmem [resolvable:$true] %s27
      %33 = dma.hbm_to_vmem [thread:$0]  %s26, 4096, %s28, [#allocation6], 128, 128, 8
    $region9: #{tpu_custom_call.1} parent=1 // pred_fallthru
      _
    // Predicated region
    $region10: #{tpu_custom_call.1} parent=1 // pred_check
      _
    $region11: #{tpu_custom_call.1} parent=1 // pred_check_branch
      %35 = sbr.rel (0) target = $region13
    $region12: #{tpu_custom_call.1} parent=1 // pred_region
      %37 = dma.done [#allocation3], 256
    $region13: #{tpu_custom_call.1} parent=1 // pred_fallthru
      _
    // Predicated region
    $region14: #{tpu_custom_call.1} parent=1 // pred_check
      _
    $region15: #{tpu_custom_call.1} parent=1 // pred_check_branch
      %39 = sbr.rel (0) target = $region17
    $region16: #{tpu_custom_call.1} parent=1 // pred_region
      %41 = dma.done [#allocation6], 4096
    $region17: #{tpu_custom_call.1} parent=1 // pred_fallthru
      _
    %v42 = vld [vmem:[#allocation2] sm:$0xff]
    %v43 = vld [vmem:[#allocation2 + $0x8] sm:$0xff]
    %v44 = vld [vmem:[#allocation5] sm:$0xff]
    %v45 = vld [vmem:[#allocation5 + $0x8] sm:$0xff]
    %v46 = vld [vmem:[#allocation5 + $0x10] sm:$0xff]
    %v47 = vld [vmem:[#allocation5 + $0x18] sm:$0xff]
    %v48 = vld [vmem:[#allocation5 + $0x20] sm:$0xff]
    %v49 = vld [vmem:[#allocation5 + $0x28] sm:$0xff]
    %v50 = vld [vmem:[#allocation5 + $0x30] sm:$0xff]
    %v51 = vld [vmem:[#allocation5 + $0x38] sm:$0xff]
    %v52 = vld [vmem:[#allocation5 + $0x40] sm:$0xff]
    %v53 = vld [vmem:[#allocation5 + $0x48] sm:$0xff]
    %v54 = vld [vmem:[#allocation5 + $0x50] sm:$0xff]
    %v55 = vld [vmem:[#allocation5 + $0x58] sm:$0xff]
    %v56 = vld [vmem:[#allocation5 + $0x60] sm:$0xff]
    %v57 = vld [vmem:[#allocation5 + $0x68] sm:$0xff]
    %v58 = vld [vmem:[#allocation5 + $0x70] sm:$0xff]
    %v59 = vld [vmem:[#allocation5 + $0x78] sm:$0xff]
    %v60 = vld [vmem:[#allocation5 + $0x80] sm:$0xff]
    %v61 = vld [vmem:[#allocation5 + $0x88] sm:$0xff]
    %v62 = vld [vmem:[#allocation5 + $0x90] sm:$0xff]
    %v63 = vld [vmem:[#allocation5 + $0x98] sm:$0xff]
    %v64 = vld [vmem:[#allocation5 + $0xa0] sm:$0xff]
    %v65 = vld [vmem:[#allocation5 + $0xa8] sm:$0xff]
    %v66 = vld [vmem:[#allocation5 + $0xb0] sm:$0xff]
    %v67 = vld [vmem:[#allocation5 + $0xb8] sm:$0xff]
    %v68 = vld [vmem:[#allocation5 + $0xc0] sm:$0xff]
    %v69 = vld [vmem:[#allocation5 + $0xc8] sm:$0xff]
    %v70 = vld [vmem:[#allocation5 + $0xd0] sm:$0xff]
    %v71 = vld [vmem:[#allocation5 + $0xd8] sm:$0xff]
    %v72 = vld [vmem:[#allocation5 + $0xe0] sm:$0xff]
    %v73 = vld [vmem:[#allocation5 + $0xe8] sm:$0xff]
    %v74 = vld [vmem:[#allocation5 + $0xf0] sm:$0xff]
    %v75 = vld [vmem:[#allocation5 + $0xf8] sm:$0xff]
    %76 = vmatpush.msra.mxu0 %v59
    %77 = vmatpush.msra.mxu0 %v58
    %78 = vmatpush.msra.mxu0 %v57
    %79 = vmatpush.msra.mxu0 %v56
    %80 = vmatpush.msra.mxu0 %v55
    %81 = vmatpush.msra.mxu0 %v54
    %82 = vmatpush.msra.mxu0 %v53
    %83 = vmatpush.msra.mxu0 %v52
    %84 = vmatpush.msra.mxu0 %v51
    %85 = vmatpush.msra.mxu0 %v50
    %86 = vmatpush.msra.mxu0 %v49
    %87 = vmatpush.msra.mxu0 %v48
    %88 = vmatpush.msra.mxu0 %v47
    %89 = vmatpush.msra.mxu0 %v46
    %90 = vmatpush.msra.mxu0 %v45
    %91 = vmatpush.msra.mxu0 %v44
    %92 = vmatmul.f32.gmra.mxu0 %v42
    %v93 = vpop.f32.mrf.mxu0
    %v94 = vadd.f32 0.0, %v93
    %95 = vdwg.mxu0
    %96 = vmatpush.msra.mxu0 %v75
    %97 = vmatpush.msra.mxu0 %v74
    %98 = vmatpush.msra.mxu0 %v73
    %99 = vmatpush.msra.mxu0 %v72
    %100 = vmatpush.msra.mxu0 %v71
    %101 = vmatpush.msra.mxu0 %v70
    %102 = vmatpush.msra.mxu0 %v69
    %103 = vmatpush.msra.mxu0 %v68
    %104 = vmatpush.msra.mxu0 %v67
    %105 = vmatpush.msra.mxu0 %v66
    %106 = vmatpush.msra.mxu0 %v65
    %107 = vmatpush.msra.mxu0 %v64
    %108 = vmatpush.msra.mxu0 %v63
    %109 = vmatpush.msra.mxu0 %v62
    %110 = vmatpush.msra.mxu0 %v61
    %111 = vmatpush.msra.mxu0 %v60
    %112 = vmatmul.f32.gmra.mxu0 %v43
    %v113 = vpop.f32.mrf.mxu0
    %v114 = vadd.f32 %v94, %v113
    %115 = vdwg.mxu0
    %116 = vst [vmem:[#allocation7] sm:$0xff] %v114
    // Predicated region
    $region18: #{tpu_custom_call.1} parent=1 // pred_check
      _
    $region19: #{tpu_custom_call.1} parent=1 // pred_check_branch
      %118 = sbr.rel (0) target = $region21
    $region20: #{tpu_custom_call.1} parent=1 // pred_region
      %120 = vsyncadd [#allocation4], 0
      %s122 = sshll.u32 [#allocation7], 4
      %s123 = int_to_ptr.vmem [resolvable:$true] %s122
      %s124 = sshll.u32 %s2, 4
      %s125 = int_to_ptr.hbm [resolvable:$true] %s124
      %127 = dma.vmem_to_hbm [thread:$0]  %s123, 128, %s125, [#allocation4]
    $region21: #{tpu_custom_call.1} parent=1 // pred_fallthru
      _
    // Predicated region
    $region22: #{tpu_custom_call.1} parent=1 // pred_check
      _
    $region23: #{tpu_custom_call.1} parent=1 // pred_check_branch
      %129 = sbr.rel (0) target = $region25
    $region24: #{tpu_custom_call.1} parent=1 // pred_region
      %131 = dma.done [#allocation4], 128
    $region25: #{tpu_custom_call.1} parent=1 // pred_fallthru
      _
    %132 = vsyncpa [#allocation3], 1
    %133 = vsyncpa [#allocation6], 1
    %134 = vsyncpa [#allocation4], 1

</llo_original>
